<compile_context>
chip_gen: v7x
topology: tpu7x:2x2x1
jax: 0.10.0
libtpu: 0.0.40
codegen_flags: <defaults>
</compile_context>

<pallas_src>
import functools

import jax
import jax.numpy as jnp
from jax.experimental import pallas as pl
from jax.experimental.pallas import tpu as pltpu


def _label_embed_kernel(labels_ref, drop_ref, table_ref, o_ref, *, num_classes):
    # labels_ref / drop_ref: (TB, 1) int32 VMEM tiles for this grid step.
    # table_ref: (V, H) embedding table, VMEM-resident (constant block index).
    # o_ref: (TB, H) output tile.
    labels = labels_ref[...]                                   # (TB, 1)
    drop = drop_ref[...]                                       # (TB, 1)
    eff = jnp.where(drop == 1, num_classes, labels)            # CFG null-class swap

    tb = o_ref.shape[0]
    v = table_ref.shape[0]

    # One-hot gather on the MXU. Rows whose id is out of range (e.g. batch
    # padding) get an all-zero one-hot row -> zero output row (discarded later).
    col = jax.lax.broadcasted_iota(jnp.int32, (tb, v), 1)      # (TB, V)
    one_hot = (col == eff).astype(jnp.float32)                 # (TB, V)
    rows = jnp.dot(
        one_hot,
        table_ref[...].astype(jnp.float32),
        preferred_element_type=jnp.float32,
        precision=jax.lax.Precision.HIGHEST,                   # keep f32-exact gather
    )
    o_ref[...] = rows.astype(o_ref.dtype)


def label_embedder_forward(labels, embedding_table, *, num_classes, dropout_prob,
                           train, rng_key=None, force_drop_ids=None, block_b=128):
    """Pallas equivalent of LabelEmbedder.forward."""
    B = labels.shape[0]
    V, H = embedding_table.shape
    labels = labels.astype(jnp.int32)

    use_dropout = dropout_prob > 0
    # token_drop mask (tiny O(B) host-side glue; randomness via JAX PRNG mirrors
    # torch.rand(B) < dropout_prob). The where() itself is fused into the kernel.
    if (train and use_dropout) or (force_drop_ids is not None):
        if force_drop_ids is None:
            if rng_key is None:
                raise ValueError("rng_key is required for training-time label dropout")
            drop_ids = (jax.random.uniform(rng_key, (B,)) < dropout_prob).astype(jnp.int32)
        else:
            drop_ids = (force_drop_ids == 1).astype(jnp.int32)
    else:
        drop_ids = jnp.zeros((B,), jnp.int32)

    # Batch tiling: TB multiple of 8 (f32 sublane), pad B up to a multiple of TB.
    tb = min(block_b, ((B + 7) // 8) * 8)
    num_tiles = pl.cdiv(B, tb)
    b_pad = num_tiles * tb
    pad = b_pad - B
    labels_p = jnp.pad(labels, (0, pad), constant_values=0).reshape(b_pad, 1)
    drop_p = jnp.pad(drop_ids, (0, pad), constant_values=0).reshape(b_pad, 1)

    itemsize = embedding_table.dtype.itemsize
    table_bytes = V * H * itemsize
    # VMEM budget: resident table + double-buffered (TB,H) out + (TB,1) inputs
    # + one-hot intermediate. Only raise the scoped limit if we actually need it
    # (keeps defaults on v7x's smaller 64 MiB physical VMEM for typical configs).
    est_vmem = (table_bytes + 2 * tb * H * itemsize + 4 * tb * 4
                + tb * V * 4 + (2 << 20))
    vmem_limit = est_vmem if est_vmem > (24 << 20) else None

    kernel = functools.partial(_label_embed_kernel, num_classes=num_classes)

    cost = pl.CostEstimate(
        flops=2 * b_pad * V * H,
        transcendentals=0,
        bytes_accessed=table_bytes + b_pad * H * itemsize + 2 * b_pad * 4,
    )

    out = pl.pallas_call(
        kernel,
        out_shape=jax.ShapeDtypeStruct((b_pad, H), embedding_table.dtype),
        grid_spec=pl.GridSpec(
            grid=(num_tiles,),
            in_specs=[
                pl.BlockSpec((tb, 1), lambda i: (i, 0)),        # labels tile
                pl.BlockSpec((tb, 1), lambda i: (i, 0)),        # drop-mask tile
                pl.BlockSpec((V, H), lambda i: (0, 0)),         # table: VMEM-resident
            ],
            out_specs=pl.BlockSpec((tb, H), lambda i: (i, 0)),
        ),
        compiler_params=pltpu.CompilerParams(
            dimension_semantics=("parallel",),                  # shard batch on v7x 2 TCs
            vmem_limit_bytes=vmem_limit,
        ),
        cost_estimate=cost,
    )(labels_p, drop_p, embedding_table)
    return out[:B]


if __name__ == "__main__":
    # Small config matching the module (nn.Embedding(num_classes + 1, hidden)).
    num_classes = 16
    hidden_size = 128
    dropout_prob = 0.1
    batch = 8

    key = jax.random.PRNGKey(0)
    k_tab, k_lab, k_drop, k_tab2, k_lab2 = jax.random.split(key, 5)

    embedding_table = jax.random.normal(
        k_tab, (num_classes + 1, hidden_size), dtype=jnp.float32) * 0.02
    labels = jax.random.randint(k_lab, (batch,), 0, num_classes, dtype=jnp.int32)

    # --- path 1: deterministic force_drop_ids, check against pure-JAX reference ---
    force_drop_ids = jnp.array([1, 0, 0, 1, 0, 0, 0, 1], dtype=jnp.int32)
    out_forced = label_embedder_forward(
        labels, embedding_table,
        num_classes=num_classes, dropout_prob=dropout_prob,
        train=False, force_drop_ids=force_drop_ids)
    jax.block_until_ready(out_forced)
    ref_labels = jnp.where(force_drop_ids == 1, num_classes, labels)
    ref = jnp.take(embedding_table, ref_labels, axis=0)
    assert jnp.allclose(out_forced, ref, rtol=1e-5, atol=1e-6), "mismatch vs reference gather"

    # --- path 2: training with random label dropout (CFG) ---
    out_train = label_embedder_forward(
        labels, embedding_table,
        num_classes=num_classes, dropout_prob=dropout_prob,
        train=True, rng_key=k_drop)
    jax.block_until_ready(out_train)
    assert out_train.shape == (batch, hidden_size)
    cand_keep = jnp.take(embedding_table, labels, axis=0)
    cand_drop = jnp.broadcast_to(embedding_table[num_classes], cand_keep.shape)
    row_keep = jnp.all(jnp.isclose(out_train, cand_keep, rtol=1e-5, atol=1e-6), axis=-1)
    row_drop = jnp.all(jnp.isclose(out_train, cand_drop, rtol=1e-5, atol=1e-6), axis=-1)
    assert bool(jnp.all(row_keep | row_drop)), "train output rows must be label or null row"

    # --- path 3: eval, no dropout -> plain embedding lookup ---
    out_eval = label_embedder_forward(
        labels, embedding_table,
        num_classes=num_classes, dropout_prob=dropout_prob,
        train=False)
    jax.block_until_ready(out_eval)
    assert jnp.allclose(out_eval, jnp.take(embedding_table, labels, axis=0),
                        rtol=1e-5, atol=1e-6)

    # --- path 4: larger, non-multiple-of-TB batch (exercises tiling + tail padding) ---
    nc2, h2, b2 = 1000, 256, 200
    table2 = jax.random.normal(k_tab2, (nc2 + 1, h2), dtype=jnp.float32) * 0.02
    labels2 = jax.random.randint(k_lab2, (b2,), 0, nc2, dtype=jnp.int32)
    force2 = (jnp.arange(b2) % 7 == 0).astype(jnp.int32)
    out2 = label_embedder_forward(
        labels2, table2,
        num_classes=nc2, dropout_prob=dropout_prob,
        train=False, force_drop_ids=force2)
    jax.block_until_ready(out2)
    ref2 = jnp.take(table2, jnp.where(force2 == 1, nc2, labels2), axis=0)
    assert out2.shape == (b2, h2)
    assert jnp.allclose(out2, ref2, rtol=1e-5, atol=1e-6), "mismatch on padded batch"

    print("KERNEL_OK")
</pallas_src>

<mosaic_0001>
module attributes {stable_mosaic.version = 11 : i64} {
  func.func @_label_embed_kernel(%arg0: i32, %arg1: memref<8x1xi32, #tpu.memory_space<vmem>>, %arg2: memref<8x1xi32, #tpu.memory_space<vmem>>, %arg3: memref<17x128xf32, #tpu.memory_space<vmem>>, %arg4: memref<8x128xf32, #tpu.memory_space<vmem>>) attributes {dimension_semantics = [#tpu.dimension_semantics<parallel>], iteration_bounds = array<i64: 1>, scalar_prefetch = 0 : i64, scratch_operands = 0 : i64, tpu.core_type = #tpu.core_type<tc>, window_params = [{transform_indices = @transform_0, window_bounds = array<i64: 8, 1>}, {transform_indices = @transform_1, window_bounds = array<i64: 8, 1>}, {pipeline_mode = #tpu.pipeline_mode<synchronous>, transform_indices = @transform_2, window_bounds = array<i64: 17, 128>}, {transform_indices = @transform_3, window_bounds = array<i64: 8, 128>}]} {
    %c0 = arith.constant 0 : index
    %c0_0 = arith.constant 0 : index
    %0 = vector.load %arg1[%c0, %c0_0] : memref<8x1xi32, #tpu.memory_space<vmem>>, vector<8x1xi32>
    %c0_1 = arith.constant 0 : index
    %c0_2 = arith.constant 0 : index
    %1 = vector.load %arg2[%c0_1, %c0_2] : memref<8x1xi32, #tpu.memory_space<vmem>>, vector<8x1xi32>
    %c1_i32 = arith.constant 1 : i32
    %2 = vector.broadcast %c1_i32 : i32 to vector<8x1xi32>
    %3 = arith.cmpi eq, %1, %2 : vector<8x1xi32>
    %c16_i32 = arith.constant 16 : i32
    %4 = vector.broadcast %c16_i32 : i32 to vector<8x1xi32>
    %5 = arith.select %3, %4, %0 : vector<8x1xi1>, vector<8x1xi32>
    %6 = tpu.iota {dimensions = array<i32: 1>} : vector<8x17xi32>
    %7 = vector.broadcast %5 : vector<8x1xi32> to vector<8x17xi32>
    %8 = arith.cmpi eq, %6, %7 : vector<8x17xi32>
    %9 = arith.extui %8 : vector<8x17xi1> to vector<8x17xi32>
    %10 = arith.sitofp %9 : vector<8x17xi32> to vector<8x17xf32>
    %c0_3 = arith.constant 0 : index
    %c0_4 = arith.constant 0 : index
    %11 = vector.load %arg3[%c0_3, %c0_4] : memref<17x128xf32, #tpu.memory_space<vmem>>, vector<17x128xf32>
    %cst = arith.constant dense<0.000000e+00> : vector<8x128xf32>
    %12 = tpu.matmul %10, %11, %cst {dimension_numbers = #tpu.dot_dimension_numbers<[1], [0], [0], [1], [0, 0, 1, 1], [], []>, precision = #tpu.contract_precision<fp32>} : vector<8x17xf32>, vector<17x128xf32>, vector<8x128xf32> -> vector<8x128xf32>
    %c0_5 = arith.constant 0 : index
    %c0_6 = arith.constant 0 : index
    %13 = vector.load %arg4[%c0_5, %c0_6] : memref<8x128xf32, #tpu.memory_space<vmem>>, vector<8x128xf32>
    tpu.vector_store %arg4[%c0_5, %c0_6], %12 {strides = array<i32>} : memref<8x128xf32, #tpu.memory_space<vmem>>, vector<8x128xf32>,
    return
  }
  func.func @transform_0(%arg0: i32) -> (i32, i32) {
    %c0_i32 = arith.constant 0 : i32
    %c0_i32_0 = arith.constant 0 : i32
    return %arg0, %c0_i32 : i32, i32
  }
  func.func @transform_1(%arg0: i32) -> (i32, i32) {
    %c0_i32 = arith.constant 0 : i32
    %c0_i32_0 = arith.constant 0 : i32
    return %arg0, %c0_i32 : i32, i32
  }
  func.func @transform_2(%arg0: i32) -> (i32, i32) {
    %c0_i32 = arith.constant 0 : i32
    %c0_i32_0 = arith.constant 0 : i32
    %c0_i32_1 = arith.constant 0 : i32
    return %c0_i32, %c0_i32_0 : i32, i32
  }
  func.func @transform_3(%arg0: i32) -> (i32, i32) {
    %c0_i32 = arith.constant 0 : i32
    %c0_i32_0 = arith.constant 0 : i32
    return %arg0, %c0_i32 : i32, i32
  }
}

</mosaic_0001>

<llo_original>
// kernel: tpu_custom_call.1
$region0: #{tpu_custom_call.1}
  #allocation0 [shape = 'u32[]', space=smem, size = 0x4, offset = 0x4, fixed_abs, tag = 'smem constant byte address 0x4 - core index']
  #allocation1 [shape = 'u32[144,128]{1,0:T(1,128)}', space=vmem, size = 0x12000, scoped, tag = 'internal scratch']
  %s0 = inlined_call_operand.vmem [shape: s32[8,1], index: 0, kind: input, shape index: {}]
  %s1 = inlined_call_operand.vmem [shape: s32[8,1], index: 1, kind: input, shape index: {}]
  %s2 = inlined_call_operand.vmem [shape: f32[17,128], index: 2, kind: input, shape index: {}]
  %s3 = inlined_call_operand.hbm [shape: f32[8,128], index: 3, kind: output, shape index: {}]
  %s4 = sld [smem:[#allocation0]]
  $region22: #{tpu_custom_call.1} parent=0
    _
  %s6 = ssub.s32 1, %s4
  %s7 = scalar_select 0, %s6, %s4
  $region1: #{tpu_custom_call.1} parent=0
    #allocation2 [shape = 'u8[4096]{0}', space=vmem, size = 0x1000, scoped, tag = 'output window, operand 0, single buffered']
    #allocation3 [shape = 's32[1]{0}', space=sflag, size = 0x4, scoped, tag = 'scoped memory for tpu_custom_call.1']
    %8 = vsyncpa [#allocation3], 0
    // Predicated region
    $region2: #{tpu_custom_call.1} parent=1 // pred_check
      _
    $region3: #{tpu_custom_call.1} parent=1 // pred_check_branch
      %10 = sbr.rel (0) target = $region5
    $region4: #{tpu_custom_call.1} parent=1 // pred_region
      _
    $region5: #{tpu_custom_call.1} parent=1 // pred_fallthru
      _
    // Predicated region
    $region6: #{tpu_custom_call.1} parent=1 // pred_check
      _
    $region7: #{tpu_custom_call.1} parent=1 // pred_check_branch
      %12 = sbr.rel (0) target = $region9
    $region8: #{tpu_custom_call.1} parent=1 // pred_region
      _
    $region9: #{tpu_custom_call.1} parent=1 // pred_fallthru
      _
    // Predicated region
    $region10: #{tpu_custom_call.1} parent=1 // pred_check
      _
    $region11: #{tpu_custom_call.1} parent=1 // pred_check_branch
      %14 = sbr.rel (0) target = $region13
    $region12: #{tpu_custom_call.1} parent=1 // pred_region
      _
    $region13: #{tpu_custom_call.1} parent=1 // pred_fallthru
      _
    %v15 = vld [vmem:[%s0] sm:$0xff]
    %v16 = vld [vmem:[%s1] sm:$0xff]
    %vm17 = vcmp.eq.s32.totalorder %v16, 1
    %v18 = vsel %vm17, 16, %v15
    %v19 = vlaneseq
    %v20 = vand.u32 %v19, 127
    %21 = vset.pattern.permute.xlu0 0
    %22 = vperm.xlu0 %21, %v18
    %v23 = vpop.permute.xlu0 %22
    %vm24 = vcmp.eq.s32.totalorder %v20, %v23
    %v25 = vsel %vm24, 1, 0
    %v26 = vcvt.s32.f32 %v25
    %v27 = vld [vmem:[%s2] sm:$0xff]
    %v28 = vld [vmem:[%s2 + $0x8] sm:$0xff]
    %v29 = vld [vmem:[%s2 + $0x10] sm:$0x1]
    %vm30 = vcmask 138240
    %v32 = vsel %vm30, %v26, 0
    %vm34 = vcmask 1040384
    %v36 = vsel %vm34, %v29, 0
    %38 = vmatprep.subr.mxu0 0.0
    %v39 = vand.u32 %v27, 4294901760
    %40 = vmatpush1.msra.mxu0 %v39
    %41 = vmatprep.subr.mxu0 0.0
    %v42 = vand.u32 %v28, 4294901760
    %43 = vmatpush1.msra.mxu0 %v42
    %44 = vmatprep.subr.mxu0 0.0
    %v45 = vand.u32 %v36, 4294901760
    %46 = vmatpush1.msra.mxu0 %v45
    %47 = vmatprep.subr.mxu0 0.0
    %48 = vmatpush1.msra.mxu0 0.0
    %49 = vmatprep.subr.mxu0 0.0
    %50 = vmatpush1.msra.mxu0 0.0
    %51 = vmatprep.subr.mxu0 0.0
    %52 = vmatpush1.msra.mxu0 0.0
    %53 = vmatprep.subr.mxu0 0.0
    %54 = vmatpush1.msra.mxu0 0.0
    %55 = vmatprep.subr.mxu0 0.0
    %56 = vmatpush1.msra.mxu0 0.0
    %57 = vmatprep.subr.mxu0 0.0
    %58 = vmatpush1.msra.mxu0 0.0
    %59 = vmatprep.subr.mxu0 0.0
    %60 = vmatpush1.msra.mxu0 0.0
    %61 = vmatprep.subr.mxu0 0.0
    %62 = vmatpush1.msra.mxu0 0.0
    %63 = vmatprep.subr.mxu0 0.0
    %64 = vmatpush1.msra.mxu0 0.0
    %65 = vmatprep.subr.mxu0 0.0
    %66 = vmatpush1.msra.mxu0 0.0
    %67 = vmatprep.subr.mxu0 0.0
    %68 = vmatpush1.msra.mxu0 0.0
    %69 = vmatprep.subr.mxu0 0.0
    %70 = vmatpush1.msra.mxu0 0.0
    %71 = vmatprep.subr.mxu0 0.0
    %72 = vmatpush1.msra.mxu0 0.0
    %73 = vmatprep.subr.mxu0 0.0
    %74 = vmatpush1.msra.mxu0 0.0
    %75 = vmatprep.subr.mxu0 0.0
    %76 = vmatpush1.msra.mxu0 0.0
    %77 = vmatprep.subr.mxu0 0.0
    %78 = vmatpush1.msra.mxu0 0.0
    %79 = vmatprep.subr.mxu0 0.0
    %80 = vmatpush1.msra.mxu0 0.0
    %81 = vmatprep.subr.mxu0 0.0
    %82 = vmatpush1.msra.mxu0 0.0
    %83 = vmatprep.subr.mxu0 0.0
    %84 = vmatpush1.msra.mxu0 0.0
    %85 = vmatprep.subr.mxu0 0.0
    %86 = vmatpush1.msra.mxu0 0.0
    %87 = vmatprep.subr.mxu0 0.0
    %88 = vmatpush1.msra.mxu0 0.0
    %89 = vmatprep.subr.mxu0 0.0
    %90 = vmatpush1.msra.mxu0 0.0
    %91 = vmatprep.subr.mxu0 0.0
    %92 = vmatpush1.msra.mxu0 0.0
    %93 = vmatprep.subr.mxu0 0.0
    %94 = vmatpush1.msra.mxu0 0.0
    %95 = vmatprep.subr.mxu0 0.0
    %96 = vmatpush1.msra.mxu0 0.0
    %97 = vmatprep.subr.mxu0 0.0
    %98 = vmatpush1.msra.mxu0 0.0
    %99 = vmatprep.subr.mxu0 0.0
    %100 = vmatpush1.msra.mxu0 0.0
    %101 = vmatprep.subr.mxu0 0.0
    %102 = vmatpush1.msra.mxu0 0.0
    %103 = vmatprep.subr.mxu0 0.0
    %104 = vmatpush1.msra.mxu0 0.0
    %105 = vmatprep.mubr.f32.mxu0 0.0
    %v106 = vand.u32 %v32, 4294901760
    %v107 = vsub.f32 %v32, %v106
    %v108 = vand.u32 %v107, 4294901760
    %v109 = vsub.f32 %v107, %v108
    %v110 = vand.u32 %v109, 4294901760
    %111 = vmatmul.mubr.f32.gmra.mrb[0].mxu0 %v110
    %v112 = vpop.f32.mrb[0].mxu0
    %v113 = vadd.f32 0.0, %v112
    %v114 = vpop.f32.mrb[0].mxu0
    %115 = vdwg.mxu0
    %116 = vmatprep.subr.mxu0 0.0
    %v117 = vand.u32 %v27, 4294901760
    %v118 = vsub.f32 %v27, %v117
    %v119 = vand.u32 %v118, 4294901760
    %v120 = vsub.f32 %v118, %v119
    %v121 = vand.u32 %v120, 4294901760
    %122 = vmatpush1.msra.mxu0 %v121
    %123 = vmatprep.subr.mxu0 0.0
    %v124 = vand.u32 %v28, 4294901760
    %v125 = vsub.f32 %v28, %v124
    %v126 = vand.u32 %v125, 4294901760
    %v127 = vsub.f32 %v125, %v126
    %v128 = vand.u32 %v127, 4294901760
    %129 = vmatpush1.msra.mxu0 %v128
    %130 = vmatprep.subr.mxu0 0.0
    %v131 = vand.u32 %v36, 4294901760
    %v132 = vsub.f32 %v36, %v131
    %v133 = vand.u32 %v132, 4294901760
    %v134 = vsub.f32 %v132, %v133
    %v135 = vand.u32 %v134, 4294901760
    %136 = vmatpush1.msra.mxu0 %v135
    %137 = vmatprep.subr.mxu0 0.0
    %138 = vmatpush1.msra.mxu0 0.0
    %139 = vmatprep.subr.mxu0 0.0
    %140 = vmatpush1.msra.mxu0 0.0
    %141 = vmatprep.subr.mxu0 0.0
    %142 = vmatpush1.msra.mxu0 0.0
    %143 = vmatprep.subr.mxu0 0.0
    %144 = vmatpush1.msra.mxu0 0.0
    %145 = vmatprep.subr.mxu0 0.0
    %146 = vmatpush1.msra.mxu0 0.0
    %147 = vmatprep.subr.mxu0 0.0
    %148 = vmatpush1.msra.mxu0 0.0
    %149 = vmatprep.subr.mxu0 0.0
    %150 = vmatpush1.msra.mxu0 0.0
    %151 = vmatprep.subr.mxu0 0.0
    %152 = vmatpush1.msra.mxu0 0.0
    %153 = vmatprep.subr.mxu0 0.0
    %154 = vmatpush1.msra.mxu0 0.0
    %155 = vmatprep.subr.mxu0 0.0
    %156 = vmatpush1.msra.mxu0 0.0
    %157 = vmatprep.subr.mxu0 0.0
    %158 = vmatpush1.msra.mxu0 0.0
    %159 = vmatprep.subr.mxu0 0.0
    %160 = vmatpush1.msra.mxu0 0.0
    %161 = vmatprep.subr.mxu0 0.0
    %162 = vmatpush1.msra.mxu0 0.0
    %163 = vmatprep.subr.mxu0 0.0
    %164 = vmatpush1.msra.mxu0 0.0
    %165 = vmatprep.subr.mxu0 0.0
    %166 = vmatpush1.msra.mxu0 0.0
    %167 = vmatprep.subr.mxu0 0.0
    %168 = vmatpush1.msra.mxu0 0.0
    %169 = vmatprep.subr.mxu0 0.0
    %170 = vmatpush1.msra.mxu0 0.0
    %171 = vmatprep.subr.mxu0 0.0
    %172 = vmatpush1.msra.mxu0 0.0
    %173 = vmatprep.subr.mxu0 0.0
    %174 = vmatpush1.msra.mxu0 0.0
    %175 = vmatprep.subr.mxu0 0.0
    %176 = vmatpush1.msra.mxu0 0.0
    %177 = vmatprep.subr.mxu0 0.0
    %178 = vmatpush1.msra.mxu0 0.0
    %179 = vmatprep.subr.mxu0 0.0
    %180 = vmatpush1.msra.mxu0 0.0
    %181 = vmatprep.subr.mxu0 0.0
    %182 = vmatpush1.msra.mxu0 0.0
    %183 = vmatprep.subr.mxu0 0.0
    %184 = vmatpush1.msra.mxu0 0.0
    %185 = vmatprep.subr.mxu0 0.0
    %186 = vmatpush1.msra.mxu0 0.0
    %187 = vmatprep.subr.mxu0 0.0
    %188 = vmatpush1.msra.mxu0 0.0
    %189 = vmatprep.subr.mxu0 0.0
    %190 = vmatpush1.msra.mxu0 0.0
    %191 = vmatprep.subr.mxu0 0.0
    %192 = vmatpush1.msra.mxu0 0.0
    %193 = vmatprep.subr.mxu0 0.0
    %194 = vmatpush1.msra.mxu0 0.0
    %195 = vmatprep.mubr.f32.mxu0 0.0
    %v196 = vand.u32 %v32, 4294901760
    %197 = vmatmul.mubr.f32.gmra.mrb[0].mxu0 %v196
    %v198 = vpop.f32.mrb[0].mxu0
    %v199 = vadd.f32 %v113, %v198
    %v200 = vpop.f32.mrb[0].mxu0
    %201 = vdwg.mxu0
    %202 = vmatprep.subr.mxu0 0.0
    %v203 = vand.u32 %v27, 4294901760
    %v204 = vsub.f32 %v27, %v203
    %205 = vmatpush1.msra.mxu0 %v204
    %206 = vmatprep.subr.mxu0 0.0
    %v207 = vand.u32 %v28, 4294901760
    %v208 = vsub.f32 %v28, %v207
    %209 = vmatpush1.msra.mxu0 %v208
    %210 = vmatprep.subr.mxu0 0.0
    %v211 = vand.u32 %v36, 4294901760
    %v212 = vsub.f32 %v36, %v211
    %213 = vmatpush1.msra.mxu0 %v212
    %214 = vmatprep.subr.mxu0 0.0
    %215 = vmatpush1.msra.mxu0 0.0
    %216 = vmatprep.subr.mxu0 0.0
    %217 = vmatpush1.msra.mxu0 0.0
    %218 = vmatprep.subr.mxu0 0.0
    %219 = vmatpush1.msra.mxu0 0.0
    %220 = vmatprep.subr.mxu0 0.0
    %221 = vmatpush1.msra.mxu0 0.0
    %222 = vmatprep.subr.mxu0 0.0
    %223 = vmatpush1.msra.mxu0 0.0
    %224 = vmatprep.subr.mxu0 0.0
    %225 = vmatpush1.msra.mxu0 0.0
    %226 = vmatprep.subr.mxu0 0.0
    %227 = vmatpush1.msra.mxu0 0.0
    %228 = vmatprep.subr.mxu0 0.0
    %229 = vmatpush1.msra.mxu0 0.0
    %230 = vmatprep.subr.mxu0 0.0
    %231 = vmatpush1.msra.mxu0 0.0
    %232 = vmatprep.subr.mxu0 0.0
    %233 = vmatpush1.msra.mxu0 0.0
    %234 = vmatprep.subr.mxu0 0.0
    %235 = vmatpush1.msra.mxu0 0.0
    %236 = vmatprep.subr.mxu0 0.0
    %237 = vmatpush1.msra.mxu0 0.0
    %238 = vmatprep.subr.mxu0 0.0
    %239 = vmatpush1.msra.mxu0 0.0
    %240 = vmatprep.subr.mxu0 0.0
    %241 = vmatpush1.msra.mxu0 0.0
    %242 = vmatprep.subr.mxu0 0.0
    %243 = vmatpush1.msra.mxu0 0.0
    %244 = vmatprep.subr.mxu0 0.0
    %245 = vmatpush1.msra.mxu0 0.0
    %246 = vmatprep.subr.mxu0 0.0
    %247 = vmatpush1.msra.mxu0 0.0
    %248 = vmatprep.subr.mxu0 0.0
    %249 = vmatpush1.msra.mxu0 0.0
    %250 = vmatprep.subr.mxu0 0.0
    %251 = vmatpush1.msra.mxu0 0.0
    %252 = vmatprep.subr.mxu0 0.0
    %253 = vmatpush1.msra.mxu0 0.0
    %254 = vmatprep.subr.mxu0 0.0
    %255 = vmatpush1.msra.mxu0 0.0
    %256 = vmatprep.subr.mxu0 0.0
    %257 = vmatpush1.msra.mxu0 0.0
    %258 = vmatprep.subr.mxu0 0.0
    %259 = vmatpush1.msra.mxu0 0.0
    %260 = vmatprep.subr.mxu0 0.0
    %261 = vmatpush1.msra.mxu0 0.0
    %262 = vmatprep.subr.mxu0 0.0
    %263 = vmatpush1.msra.mxu0 0.0
    %264 = vmatprep.subr.mxu0 0.0
    %265 = vmatpush1.msra.mxu0 0.0
    %266 = vmatprep.subr.mxu0 0.0
    %267 = vmatpush1.msra.mxu0 0.0
    %268 = vmatprep.subr.mxu0 0.0
    %269 = vmatpush1.msra.mxu0 0.0
    %270 = vmatprep.subr.mxu0 0.0
    %271 = vmatpush1.msra.mxu0 0.0
    %272 = vmatprep.mubr.f32.mxu0 0.0
    %v273 = vand.u32 %v32, 4294901760
    %v274 = vsub.f32 %v32, %v273
    %275 = vmatmul.mubr.f32.gmra.mrb[0].mxu0 %v274
    %v276 = vpop.f32.mrb[0].mxu0
    %v277 = vadd.f32 %v199, %v276
    %v278 = vpop.f32.mrb[0].mxu0
    %279 = vdwg.mxu0
    %280 = vmatprep.subr.mxu0 0.0
    %v281 = vand.u32 %v27, 4294901760
    %282 = vmatpush1.msra.mxu0 %v281
    %283 = vmatprep.subr.mxu0 0.0
    %v284 = vand.u32 %v28, 4294901760
    %285 = vmatpush1.msra.mxu0 %v284
    %286 = vmatprep.subr.mxu0 0.0
    %v287 = vand.u32 %v36, 4294901760
    %288 = vmatpush1.msra.mxu0 %v287
    %289 = vmatprep.subr.mxu0 0.0
    %290 = vmatpush1.msra.mxu0 0.0
    %291 = vmatprep.subr.mxu0 0.0
    %292 = vmatpush1.msra.mxu0 0.0
    %293 = vmatprep.subr.mxu0 0.0
    %294 = vmatpush1.msra.mxu0 0.0
    %295 = vmatprep.subr.mxu0 0.0
    %296 = vmatpush1.msra.mxu0 0.0
    %297 = vmatprep.subr.mxu0 0.0
    %298 = vmatpush1.msra.mxu0 0.0
    %299 = vmatprep.subr.mxu0 0.0
    %300 = vmatpush1.msra.mxu0 0.0
    %301 = vmatprep.subr.mxu0 0.0
    %302 = vmatpush1.msra.mxu0 0.0
    %303 = vmatprep.subr.mxu0 0.0
    %304 = vmatpush1.msra.mxu0 0.0
    %305 = vmatprep.subr.mxu0 0.0
    %306 = vmatpush1.msra.mxu0 0.0
    %307 = vmatprep.subr.mxu0 0.0
    %308 = vmatpush1.msra.mxu0 0.0
    %309 = vmatprep.subr.mxu0 0.0
    %310 = vmatpush1.msra.mxu0 0.0
    %311 = vmatprep.subr.mxu0 0.0
    %312 = vmatpush1.msra.mxu0 0.0
    %313 = vmatprep.subr.mxu0 0.0
    %314 = vmatpush1.msra.mxu0 0.0
    %315 = vmatprep.subr.mxu0 0.0
    %316 = vmatpush1.msra.mxu0 0.0
    %317 = vmatprep.subr.mxu0 0.0
    %318 = vmatpush1.msra.mxu0 0.0
    %319 = vmatprep.subr.mxu0 0.0
    %320 = vmatpush1.msra.mxu0 0.0
    %321 = vmatprep.subr.mxu0 0.0
    %322 = vmatpush1.msra.mxu0 0.0
    %323 = vmatprep.subr.mxu0 0.0
    %324 = vmatpush1.msra.mxu0 0.0
    %325 = vmatprep.subr.mxu0 0.0
    %326 = vmatpush1.msra.mxu0 0.0
    %327 = vmatprep.subr.mxu0 0.0
    %328 = vmatpush1.msra.mxu0 0.0
    %329 = vmatprep.subr.mxu0 0.0
    %330 = vmatpush1.msra.mxu0 0.0
    %331 = vmatprep.subr.mxu0 0.0
    %332 = vmatpush1.msra.mxu0 0.0
    %333 = vmatprep.subr.mxu0 0.0
    %334 = vmatpush1.msra.mxu0 0.0
    %335 = vmatprep.subr.mxu0 0.0
    %336 = vmatpush1.msra.mxu0 0.0
    %337 = vmatprep.subr.mxu0 0.0
    %338 = vmatpush1.msra.mxu0 0.0
    %339 = vmatprep.subr.mxu0 0.0
    %340 = vmatpush1.msra.mxu0 0.0
    %341 = vmatprep.subr.mxu0 0.0
    %342 = vmatpush1.msra.mxu0 0.0
    %343 = vmatprep.subr.mxu0 0.0
    %344 = vmatpush1.msra.mxu0 0.0
    %345 = vmatprep.subr.mxu0 0.0
    %346 = vmatpush1.msra.mxu0 0.0
    %347 = vmatprep.mubr.f32.mxu0 0.0
    %v348 = vand.u32 %v32, 4294901760
    %v349 = vsub.f32 %v32, %v348
    %v350 = vand.u32 %v349, 4294901760
    %351 = vmatmul.mubr.f32.gmra.mrb[0].mxu0 %v350
    %v352 = vpop.f32.mrb[0].mxu0
    %v353 = vadd.f32 %v277, %v352
    %v354 = vpop.f32.mrb[0].mxu0
    %355 = vdwg.mxu0
    %356 = vmatprep.subr.mxu0 0.0
    %v357 = vand.u32 %v27, 4294901760
    %v358 = vsub.f32 %v27, %v357
    %v359 = vand.u32 %v358, 4294901760
    %360 = vmatpush1.msra.mxu0 %v359
    %361 = vmatprep.subr.mxu0 0.0
    %v362 = vand.u32 %v28, 4294901760
    %v363 = vsub.f32 %v28, %v362
    %v364 = vand.u32 %v363, 4294901760
    %365 = vmatpush1.msra.mxu0 %v364
    %366 = vmatprep.subr.mxu0 0.0
    %v367 = vand.u32 %v36, 4294901760
    %v368 = vsub.f32 %v36, %v367
    %v369 = vand.u32 %v368, 4294901760
    %370 = vmatpush1.msra.mxu0 %v369
    %371 = vmatprep.subr.mxu0 0.0
    %372 = vmatpush1.msra.mxu0 0.0
    %373 = vmatprep.subr.mxu0 0.0
    %374 = vmatpush1.msra.mxu0 0.0
    %375 = vmatprep.subr.mxu0 0.0
    %376 = vmatpush1.msra.mxu0 0.0
    %377 = vmatprep.subr.mxu0 0.0
    %378 = vmatpush1.msra.mxu0 0.0
    %379 = vmatprep.subr.mxu0 0.0
    %380 = vmatpush1.msra.mxu0 0.0
    %381 = vmatprep.subr.mxu0 0.0
    %382 = vmatpush1.msra.mxu0 0.0
    %383 = vmatprep.subr.mxu0 0.0
    %384 = vmatpush1.msra.mxu0 0.0
    %385 = vmatprep.subr.mxu0 0.0
    %386 = vmatpush1.msra.mxu0 0.0
    %387 = vmatprep.subr.mxu0 0.0
    %388 = vmatpush1.msra.mxu0 0.0
    %389 = vmatprep.subr.mxu0 0.0
    %390 = vmatpush1.msra.mxu0 0.0
    %391 = vmatprep.subr.mxu0 0.0
    %392 = vmatpush1.msra.mxu0 0.0
    %393 = vmatprep.subr.mxu0 0.0
    %394 = vmatpush1.msra.mxu0 0.0
    %395 = vmatprep.subr.mxu0 0.0
    %396 = vmatpush1.msra.mxu0 0.0
    %397 = vmatprep.subr.mxu0 0.0
    %398 = vmatpush1.msra.mxu0 0.0
    %399 = vmatprep.subr.mxu0 0.0
    %400 = vmatpush1.msra.mxu0 0.0
    %401 = vmatprep.subr.mxu0 0.0
    %402 = vmatpush1.msra.mxu0 0.0
    %403 = vmatprep.subr.mxu0 0.0
    %404 = vmatpush1.msra.mxu0 0.0
    %405 = vmatprep.subr.mxu0 0.0
    %406 = vmatpush1.msra.mxu0 0.0
    %407 = vmatprep.subr.mxu0 0.0
    %408 = vmatpush1.msra.mxu0 0.0
    %409 = vmatprep.subr.mxu0 0.0
    %410 = vmatpush1.msra.mxu0 0.0
    %411 = vmatprep.subr.mxu0 0.0
    %412 = vmatpush1.msra.mxu0 0.0
    %413 = vmatprep.subr.mxu0 0.0
    %414 = vmatpush1.msra.mxu0 0.0
    %415 = vmatprep.subr.mxu0 0.0
    %416 = vmatpush1.msra.mxu0 0.0
    %417 = vmatprep.subr.mxu0 0.0
    %418 = vmatpush1.msra.mxu0 0.0
    %419 = vmatprep.subr.mxu0 0.0
    %420 = vmatpush1.msra.mxu0 0.0
    %421 = vmatprep.subr.mxu0 0.0
    %422 = vmatpush1.msra.mxu0 0.0
    %423 = vmatprep.subr.mxu0 0.0
    %424 = vmatpush1.msra.mxu0 0.0
    %425 = vmatprep.subr.mxu0 0.0
    %426 = vmatpush1.msra.mxu0 0.0
    %427 = vmatprep.subr.mxu0 0.0
    %428 = vmatpush1.msra.mxu0 0.0
    %429 = vmatprep.mubr.f32.mxu0 0.0
    %v430 = vand.u32 %v32, 4294901760
    %431 = vmatmul.mubr.f32.gmra.mrb[0].mxu0 %v430
    %v432 = vpop.f32.mrb[0].mxu0
    %v433 = vadd.f32 %v353, %v432
    %v434 = vpop.f32.mrb[0].mxu0
    %435 = vdwg.mxu0
    %436 = vmatprep.subr.mxu0 0.0
    %v437 = vand.u32 %v27, 4294901760
    %438 = vmatpush1.msra.mxu0 %v437
    %439 = vmatprep.subr.mxu0 0.0
    %v440 = vand.u32 %v28, 4294901760
    %441 = vmatpush1.msra.mxu0 %v440
    %442 = vmatprep.subr.mxu0 0.0
    %v443 = vand.u32 %v36, 4294901760
    %444 = vmatpush1.msra.mxu0 %v443
    %445 = vmatprep.subr.mxu0 0.0
    %446 = vmatpush1.msra.mxu0 0.0
    %447 = vmatprep.subr.mxu0 0.0
    %448 = vmatpush1.msra.mxu0 0.0
    %449 = vmatprep.subr.mxu0 0.0
    %450 = vmatpush1.msra.mxu0 0.0
    %451 = vmatprep.subr.mxu0 0.0
    %452 = vmatpush1.msra.mxu0 0.0
    %453 = vmatprep.subr.mxu0 0.0
    %454 = vmatpush1.msra.mxu0 0.0
    %455 = vmatprep.subr.mxu0 0.0
    %456 = vmatpush1.msra.mxu0 0.0
    %457 = vmatprep.subr.mxu0 0.0
    %458 = vmatpush1.msra.mxu0 0.0
    %459 = vmatprep.subr.mxu0 0.0
    %460 = vmatpush1.msra.mxu0 0.0
    %461 = vmatprep.subr.mxu0 0.0
    %462 = vmatpush1.msra.mxu0 0.0
    %463 = vmatprep.subr.mxu0 0.0
    %464 = vmatpush1.msra.mxu0 0.0
    %465 = vmatprep.subr.mxu0 0.0
    %466 = vmatpush1.msra.mxu0 0.0
    %467 = vmatprep.subr.mxu0 0.0
    %468 = vmatpush1.msra.mxu0 0.0
    %469 = vmatprep.subr.mxu0 0.0
    %470 = vmatpush1.msra.mxu0 0.0
    %471 = vmatprep.subr.mxu0 0.0
    %472 = vmatpush1.msra.mxu0 0.0
    %473 = vmatprep.subr.mxu0 0.0
    %474 = vmatpush1.msra.mxu0 0.0
    %475 = vmatprep.subr.mxu0 0.0
    %476 = vmatpush1.msra.mxu0 0.0
    %477 = vmatprep.subr.mxu0 0.0
    %478 = vmatpush1.msra.mxu0 0.0
    %479 = vmatprep.subr.mxu0 0.0
    %480 = vmatpush1.msra.mxu0 0.0
    %481 = vmatprep.subr.mxu0 0.0
    %482 = vmatpush1.msra.mxu0 0.0
    %483 = vmatprep.subr.mxu0 0.0
    %484 = vmatpush1.msra.mxu0 0.0
    %485 = vmatprep.subr.mxu0 0.0
    %486 = vmatpush1.msra.mxu0 0.0
    %487 = vmatprep.subr.mxu0 0.0
    %488 = vmatpush1.msra.mxu0 0.0
    %489 = vmatprep.subr.mxu0 0.0
    %490 = vmatpush1.msra.mxu0 0.0
    %491 = vmatprep.subr.mxu0 0.0
    %492 = vmatpush1.msra.mxu0 0.0
    %493 = vmatprep.subr.mxu0 0.0
    %494 = vmatpush1.msra.mxu0 0.0
    %495 = vmatprep.subr.mxu0 0.0
    %496 = vmatpush1.msra.mxu0 0.0
    %497 = vmatprep.subr.mxu0 0.0
    %498 = vmatpush1.msra.mxu0 0.0
    %499 = vmatprep.subr.mxu0 0.0
    %500 = vmatpush1.msra.mxu0 0.0
    %501 = vmatprep.subr.mxu0 0.0
    %502 = vmatpush1.msra.mxu0 0.0
    %503 = vmatprep.mubr.f32.mxu0 0.0
    %v504 = vand.u32 %v32, 4294901760
    %505 = vmatmul.mubr.f32.gmra.mrb[0].mxu0 %v504
    %v506 = vpop.f32.mrb[0].mxu0
    %v507 = vadd.f32 %v433, %v506
    %v508 = vpop.f32.mrb[0].mxu0
    %509 = vdwg.mxu0
    %510 = vst [vmem:[#allocation2] sm:$0xff] %v507
    // Predicated region
    $region14: #{tpu_custom_call.1} parent=1 // pred_check
      _
    $region15: #{tpu_custom_call.1} parent=1 // pred_check_branch
      %512 = sbr.rel (0) target = $region17
    $region16: #{tpu_custom_call.1} parent=1 // pred_region
      %s514 = ssub.s32 128, 128
      %515 = vsyncadd [#allocation3], %s514
      %s517 = sshll.u32 [#allocation2], 4
      %s518 = int_to_ptr.vmem [resolvable:$true] %s517
      %520 = dma.vmem_to_hbm [thread:$0]  %s518, 128, %s3, [#allocation3]
    $region17: #{tpu_custom_call.1} parent=1 // pred_fallthru
      _
    // Predicated region
    $region18: #{tpu_custom_call.1} parent=1 // pred_check
      _
    $region19: #{tpu_custom_call.1} parent=1 // pred_check_branch
      %522 = sbr.rel (0) target = $region21
    $region20: #{tpu_custom_call.1} parent=1 // pred_region
      %523 = dma.done [#allocation3], 128
    $region21: #{tpu_custom_call.1} parent=1 // pred_fallthru
      _
    %524 = vsyncpa [#allocation3], 1

</llo_original>
